<compile_context>
chip_gen: v5e
topology: v5e:2x2
jax: 0.10.0
libtpu: 0.0.40
codegen_flags: <defaults>
</compile_context>

<pallas_src>
import jax
import jax.numpy as jnp
from jax import lax
from jax.experimental import pallas as pl
from jax.experimental.pallas import tpu as pltpu


# ---------------------------------------------------------------------------
# Kernel: per-row affine normalization of a lane-dense (rows, lanes) tile.
# ---------------------------------------------------------------------------
def _bn_norm_kernel(x_ref, ss_ref, o_ref):
    """Normalize a (row_block, lane_block) tile with per-row scale/shift.

    ss_ref is (row_block, 2) f32: column 0 = scale, column 1 = shift.
    """
    scale = ss_ref[:, 0:1]                                  # (rows, 1) f32
    shift = ss_ref[:, 1:2]                                  # (rows, 1) f32
    xv = x_ref[...].astype(jnp.float32)                     # upcast in vregs
    o_ref[...] = (xv * scale + shift).astype(o_ref.dtype)   # lane-broadcast FMA


def _pad_up(v, m):
    return ((v + m - 1) // m) * m


def _vmem_capacity_bytes():
    """Physical VMEM per TensorCore; conservative (v7x, 64 MiB) fallback."""
    try:
        return int(pltpu.get_tpu_info().vmem_capacity_bytes)
    except Exception:
        return 64 * 1024 * 1024


def balanced_bn_v6_forward(x, params, label=None):
    """Forward pass of BalancedBNV6.

    x:      (N, C, H, W), any float dtype (f32 / bf16)
    params: dict with 'weight','bias','global_mean','global_var',
            'local_mean' (K, C), 'local_var' (K, C), 'gamma' (1,), 'eps' float
    label:  optional (N,) int32 per-sample class index (default: all zeros)
    """
    N, C, H, W = x.shape
    eps = float(params["eps"])
    if label is None:
        label = jnp.zeros((N,), dtype=jnp.int32)

    # --- glue: mix global / per-class local statistics (tiny, plain JAX) ---
    # NOTE: gamma is used raw in the mix, matching the module's raw Parameter.
    gamma = params["gamma"][0]
    local_mean_sel = params["local_mean"][label]            # (N, C)
    local_var_sel = params["local_var"][label]              # (N, C)
    mean = gamma * params["global_mean"][None, :] + (1.0 - gamma) * local_mean_sel
    var = gamma * params["global_var"][None, :] + (1.0 - gamma) * local_var_sel

    # Per-(sample, channel) scale/shift in f32 (only N*C elements).
    inv_std = lax.rsqrt(var.astype(jnp.float32) + eps)      # (N, C)
    scale = params["weight"][None, :].astype(jnp.float32) * inv_std
    shift = params["bias"][None, :].astype(jnp.float32) - mean.astype(jnp.float32) * scale

    rows = N * C
    hw = H * W

    if hw < 128:
        # Small-spatial regime: lanes would be badly underfilled and every
        # store masked; the op is HBM-bound so fused XLA is at the roofline.
        # TODO(synk): lane-dense Pallas path (N x C*H*W factorization) for H*W < 128.
        y = x.astype(jnp.float32) * scale[:, :, None, None] + shift[:, :, None, None]
        return y.astype(x.dtype)

    x2 = x.reshape(rows, hw)                                # native dtype, no pad/copy
    ss = jnp.stack([scale.reshape(rows), shift.reshape(rows)], axis=-1)  # (rows, 2) f32

    # ------------------- tile selection / VMEM budgeting -------------------
    itemsize = jnp.dtype(x.dtype).itemsize
    align = 8 if itemsize >= 4 else (16 if itemsize == 2 else 32)   # sublane packing

    vmem_cap = _vmem_capacity_bytes()
    # Keep all double-buffered blocks well under every generation's scoped
    # default (v7x: 32 MiB scoped / 64 MiB physical per TC).
    budget = min(24 * 1024 * 1024, (vmem_cap * 3) // 8)

    def per_row_bytes(lane_blk):
        # 2 x input + 2 x output buffers, plus the lane-padded
        # (row_block, 2) -> (row_block, 128) f32 scale/shift double buffer.
        return 4 * _pad_up(lane_blk, 128) * itemsize + 2 * 128 * 4

    # Prefer a fully contiguous full-width block whenever a minimal-row
    # full-width block fits the budget (no row-strided DMA, unmasked stores).
    if align * per_row_bytes(hw) <= budget:
        lane_block = hw
    else:
        usable = budget - 2 * align * 128 * 4
        lane_block = (usable // (4 * align * itemsize)) // 128 * 128
        lane_block = max(128, min(lane_block, hw))

    rb = (budget // per_row_bytes(lane_block)) // align * align
    rb = max(align, rb)
    row_block = rows if rb >= rows else rb

    # v7x has 2 TensorCores: guarantee >= 2 blocks along a "parallel" axis so
    # both cores get work, unless the tensor is too tiny to split legally.
    if pl.cdiv(rows, row_block) * pl.cdiv(hw, lane_block) < 2:
        if rows >= 2 * align:
            row_block = max(align, ((rows // 2) // align) * align)
        elif hw >= 2 * 128:
            lane_block = max(128, ((hw // 2) // 128) * 128)

    grid = (pl.cdiv(rows, row_block), pl.cdiv(hw, lane_block))

    # Explicit scoped-VMEM limit sized to the actual (layout-padded) buffers.
    x_blk_bytes = _pad_up(row_block, align) * _pad_up(lane_block, 128) * itemsize
    ss_blk_bytes = _pad_up(row_block, 8) * 128 * 4
    total_vmem = 4 * x_blk_bytes + 2 * ss_blk_bytes
    vmem_limit = int(max(16 * 1024 * 1024,
                         min(48 * 1024 * 1024, (total_vmem * 3) // 2 + (2 << 20))))

    cost = pl.CostEstimate(
        flops=2 * rows * hw,
        transcendentals=0,
        bytes_accessed=2 * rows * hw * itemsize + rows * 2 * 4,
    )

    out = pl.pallas_call(
        _bn_norm_kernel,
        out_shape=jax.ShapeDtypeStruct((rows, hw), x.dtype),
        grid_spec=pltpu.PrefetchScalarGridSpec(
            num_scalar_prefetch=0,
            grid=grid,
            in_specs=[
                pl.BlockSpec((row_block, lane_block), lambda i, j: (i, j)),
                # Block index only changes with i (outer axis), so the runtime
                # re-fetches this small stream once per row-block, not per step.
                pl.BlockSpec((row_block, 2), lambda i, j: (i, 0)),
            ],
            out_specs=pl.BlockSpec((row_block, lane_block), lambda i, j: (i, j)),
        ),
        compiler_params=pltpu.CompilerParams(
            dimension_semantics=("parallel", "parallel"),
            vmem_limit_bytes=vmem_limit,
        ),
        cost_estimate=cost,
    )(x2, ss)

    return out.reshape(N, C, H, W)


def init_balanced_bn_v6_params(key, num_features, num_classes=1, eps=1e-5):
    """Deterministic synthetic init mirroring BalancedBNV6.__init__ shapes."""
    k1, k2, k3, k4 = jax.random.split(key, 4)
    weight = jax.random.normal(k1, (num_features,), jnp.float32) * 0.1 + 1.0
    bias = jax.random.normal(k2, (num_features,), jnp.float32) * 0.1
    running_mean = jax.random.normal(k3, (num_features,), jnp.float32) * 0.05
    running_var = jax.random.uniform(k4, (num_features,), jnp.float32,
                                     minval=0.5, maxval=1.5)
    return {
        "weight": weight,
        "bias": bias,
        "global_mean": running_mean,
        "global_var": running_var,
        # local stats initialized as expanded copies of running stats
        "local_mean": jnp.broadcast_to(running_mean[None, :],
                                       (num_classes, num_features)).copy(),
        "local_var": jnp.broadcast_to(running_var[None, :],
                                      (num_classes, num_features)).copy(),
        "gamma": jnp.array([0.0], jnp.float32),   # nn.Parameter([0.0])
        "eps": eps,
    }


if __name__ == "__main__":
    key = jax.random.PRNGKey(0)
    kx, kp, kl = jax.random.split(key, 3)

    N, C, H, W = 2, 4, 16, 16
    num_classes = 3
    x = jax.random.normal(kx, (N, C, H, W), jnp.float32)
    params = init_balanced_bn_v6_params(kp, num_features=C, num_classes=num_classes)
    label = jax.random.randint(kl, (N,), 0, num_classes, jnp.int32)

    y = balanced_bn_v6_forward(x, params, label)
    y = jax.block_until_ready(y)

    # pure-JAX reference to validate the kernel
    def ref_fn(xin, p, lab):
        g = p["gamma"][0]
        m = g * p["global_mean"][None, :] + (1 - g) * p["local_mean"][lab]
        v = g * p["global_var"][None, :] + (1 - g) * p["local_var"][lab]
        r = (xin - m[:, :, None, None]) * lax.rsqrt(v[:, :, None, None] + p["eps"])
        return r * p["weight"][None, :, None, None] + p["bias"][None, :, None, None]

    ref = ref_fn(x, params, label)
    assert y.shape == (N, C, H, W)
    assert jnp.max(jnp.abs(y - ref)) < 1e-5, "mismatch vs reference (Pallas path)"

    # small-spatial fallback path (H*W < 128) quick sanity check
    xs = jax.random.normal(kx, (N, C, 5, 5), jnp.float32)
    ys = jax.block_until_ready(balanced_bn_v6_forward(xs, params, label))
    refs = ref_fn(xs, params, label)
    assert jnp.max(jnp.abs(ys - refs)) < 1e-5, "mismatch vs reference (fallback path)"

    print("KERNEL_OK")
</pallas_src>

<mosaic_0001>
module attributes {stable_mosaic.version = 11 : i64} {
  func.func @_bn_norm_kernel(%arg0: i32, %arg1: i32, %arg2: memref<8x128xf32, #tpu.memory_space<vmem>>, %arg3: memref<8x2xf32, #tpu.memory_space<vmem>>, %arg4: memref<8x128xf32, #tpu.memory_space<vmem>>) attributes {dimension_semantics = [#tpu.dimension_semantics<parallel>, #tpu.dimension_semantics<parallel>], iteration_bounds = array<i64: 1, 2>, scalar_prefetch = 0 : i64, scratch_operands = 0 : i64, tpu.core_type = #tpu.core_type<tc>, window_params = [{transform_indices = @transform_0, window_bounds = array<i64: 8, 128>}, {transform_indices = @transform_1, window_bounds = array<i64: 8, 2>}, {transform_indices = @transform_2, window_bounds = array<i64: 8, 128>}]} {
    %c0 = arith.constant 0 : index
    %c0_0 = arith.constant 0 : index
    %0 = vector.load %arg3[%c0, %c0_0] : memref<8x2xf32, #tpu.memory_space<vmem>>, vector<8x1xf32>
    %c0_1 = arith.constant 0 : index
    %c1 = arith.constant 1 : index
    %1 = vector.load %arg3[%c0_1, %c1] : memref<8x2xf32, #tpu.memory_space<vmem>>, vector<8x1xf32>
    %c0_2 = arith.constant 0 : index
    %c0_3 = arith.constant 0 : index
    %2 = vector.load %arg2[%c0_2, %c0_3] : memref<8x128xf32, #tpu.memory_space<vmem>>, vector<8x128xf32>
    %3 = vector.broadcast %0 : vector<8x1xf32> to vector<8x128xf32>
    %4 = arith.mulf %2, %3 : vector<8x128xf32>
    %5 = vector.broadcast %1 : vector<8x1xf32> to vector<8x128xf32>
    %6 = arith.addf %4, %5 : vector<8x128xf32>
    %c0_4 = arith.constant 0 : index
    %c0_5 = arith.constant 0 : index
    %7 = vector.load %arg4[%c0_4, %c0_5] : memref<8x128xf32, #tpu.memory_space<vmem>>, vector<8x128xf32>
    tpu.vector_store %arg4[%c0_4, %c0_5], %6 {strides = array<i32>} : memref<8x128xf32, #tpu.memory_space<vmem>>, vector<8x128xf32>,
    return
  }
  func.func @transform_0(%arg0: i32, %arg1: i32) -> (i32, i32) {
    %c0_i32 = arith.constant 0 : i32
    return %arg0, %arg1 : i32, i32
  }
  func.func @transform_1(%arg0: i32, %arg1: i32) -> (i32, i32) {
    %c0_i32 = arith.constant 0 : i32
    %c0_i32_0 = arith.constant 0 : i32
    return %arg0, %c0_i32 : i32, i32
  }
  func.func @transform_2(%arg0: i32, %arg1: i32) -> (i32, i32) {
    %c0_i32 = arith.constant 0 : i32
    return %arg0, %arg1 : i32, i32
  }
}

</mosaic_0001>

<llo_original>
// kernel: tpu_custom_call.1
$region0: #{tpu_custom_call.1}
  #allocation0 [shape = 'u32[]', space=smem, size = 0x4, offset = 0x4, fixed_abs, tag = 'smem constant byte address 0x4 - core index']
  #allocation1 [shape = 'u32[72,128]{1,0:T(1,128)}', space=vmem, size = 0x9000, scoped, tag = 'internal scratch']
  %s0 = inlined_call_operand.hbm [shape: f32[8,256], index: 0, kind: input, shape index: {}]
  %s1 = inlined_call_operand.vmem [shape: f32[8,2], index: 1, kind: input, shape index: {}]
  %s2 = inlined_call_operand.hbm [shape: f32[8,256], index: 2, kind: output, shape index: {}]
  %s3 = sld [smem:[#allocation0]]
  $region45: #{tpu_custom_call.1} parent=0
    _
  %s5 = ssub.s32 1, %s3
  %s6 = scalar_select 0, %s5, %s3
  $region1: #{tpu_custom_call.1} parent=0
    #allocation2 [shape = 'u8[8192]{0}', space=vmem, size = 0x2000, scoped, tag = 'input window, operand 0']
    #allocation3 [shape = 's32[2]{0}', space=sflag, size = 0x8, scoped, tag = 'scoped memory for tpu_custom_call.1']
    #allocation4 [shape = 's32[2]{0}', space=sflag, size = 0x8, scoped, tag = 'scoped memory for tpu_custom_call.1']
    #allocation5 [shape = 'u8[8192]{0}', space=vmem, size = 0x2000, scoped, tag = 'output window, operand 0']
    %7 = vsyncpa [#allocation3], 0
    %s8 = scalar_lea.sflag [#allocation3], 1
    %9 = vsyncpa %s8, 0
    %10 = vsyncpa [#allocation4], 0
    %s11 = scalar_lea.sflag [#allocation4], 1
    %12 = vsyncpa %s11, 0
    loop: start=0, step=1, limit=4
    $region2: #{tpu_custom_call.1} parent=1 // loop_pre_header
      _
    $region3: #{tpu_custom_call.1} parent=1 // loop_header
      %s14 = sphi 0, %s18
      %p15 = scmp.ge.s32.totalorder %s14, 4
      %s21 = sphi 0, %s33
      %s22 = sphi 0, %s29
      %s23 = sphi 0, %s21
      %s24 = sphi 0, %s22
      %s25 = sphi 0, %s23
      %s26 = sphi 0, %s24
      %s38 = sphi 0, %s40
      %s41 = sphi 0, %s38
      %s42 = sphi 0, %s41
      %s58 = sphi 0, %s42
      %s64 = sphi 0, %s66
      %s67 = sphi 0, %s64
      %s68 = sphi 0, %s67
      %s84 = sphi 0, %s68
      %s92 = sphi 0, %s94
      %s95 = sphi 0, %s92
      %s96 = sphi 0, %s95
      %s112 = sphi 0, %s96
    $region4: #{tpu_custom_call.1} parent=1 // loop_header_branch
      %17 = sbr.rel (%p15) target = $region8
    $region5: #{tpu_custom_call.1} parent=1 // loop_body
      %s19 = ssub.s32 %s14, 1
      %s20 = ssub.s32 %s14, 2
      %s27 = sadd.s32 1, %s22
      %p28 = scmp.ge.s32.totalorder %s27, 2
      %s29 = scalar_select %p28, 0, %s27
      %s30 = sadd.s32 1, %s21
      %s31 = scalar_select %p28, %s30, %s21
      %p32 = scmp.ge.s32.totalorder %s31, 1
      %s33 = scalar_select %p32, 0, %s31
      %s34 = ssub.s32 %s21, %s33
      %s35 = ssub.s32 %s22, %s29
      %s36 = sor.u32 %s34, %s35
      %p37 = scmp.eq.s32.totalorder %s36, 0
      %s39 = sadd.s32 %s38, 1
      %s40 = scalar_select %p37, %s38, %s39
      %p43 = pneg %p37
      %p44 = scmp.eq.s32.totalorder %s14, 1
      %p45 = por %p43, %p44
      %p46 = scmp.ne.s32.totalorder %s38, %s41
      %p47 = scmp.eq.s32.totalorder %s14, 0
      %p48 = por %p46, %p47
      %p49 = scmp.ne.s32.totalorder %s38, %s41
      %p50 = scmp.eq.s32.totalorder %s19, 1
      %p51 = por %p49, %p50
      %p52 = scmp.ne.s32.totalorder %s41, %s42
      %p53 = scmp.eq.s32.totalorder %s19, 0
      %p54 = por %p52, %p53
      %p55 = scmp.ne.s32.totalorder %s41, %s42
      %p56 = scmp.eq.s32.totalorder %s20, 1
      %p57 = por %p55, %p56
      %p59 = scmp.ne.s32.totalorder %s42, %s58
      %p60 = scmp.eq.s32.totalorder %s20, 0
      %p61 = por %p59, %p60
      %s62 = ssub.s32 %s21, %s33
      %p63 = scmp.eq.s32.totalorder %s62, 0
      %s65 = sadd.s32 %s64, 1
      %s66 = scalar_select %p63, %s64, %s65
      %p69 = pneg %p63
      %p70 = scmp.eq.s32.totalorder %s14, 1
      %p71 = por %p69, %p70
      %p72 = scmp.ne.s32.totalorder %s64, %s67
      %p73 = scmp.eq.s32.totalorder %s14, 0
      %p74 = por %p72, %p73
      %p75 = scmp.ne.s32.totalorder %s64, %s67
      %p76 = scmp.eq.s32.totalorder %s19, 1
      %p77 = por %p75, %p76
      %p78 = scmp.ne.s32.totalorder %s67, %s68
      %p79 = scmp.eq.s32.totalorder %s19, 0
      %p80 = por %p78, %p79
      %p81 = scmp.ne.s32.totalorder %s67, %s68
      %p82 = scmp.eq.s32.totalorder %s20, 1
      %p83 = por %p81, %p82
      %p85 = scmp.ne.s32.totalorder %s68, %s84
      %p86 = scmp.eq.s32.totalorder %s20, 0
      %p87 = por %p85, %p86
      %s88 = ssub.s32 %s21, %s33
      %s89 = ssub.s32 %s22, %s29
      %s90 = sor.u32 %s88, %s89
      %p91 = scmp.eq.s32.totalorder %s90, 0
      %s93 = sadd.s32 %s92, 1
      %s94 = scalar_select %p91, %s92, %s93
      %p97 = pneg %p91
      %p98 = scmp.eq.s32.totalorder %s14, 1
      %p99 = por %p97, %p98
      %p100 = scmp.ne.s32.totalorder %s92, %s95
      %p101 = scmp.eq.s32.totalorder %s14, 0
      %p102 = por %p100, %p101
      %p103 = scmp.ne.s32.totalorder %s92, %s95
      %p104 = scmp.eq.s32.totalorder %s19, 1
      %p105 = por %p103, %p104
      %p106 = scmp.ne.s32.totalorder %s95, %s96
      %p107 = scmp.eq.s32.totalorder %s19, 0
      %p108 = por %p106, %p107
      %p109 = scmp.ne.s32.totalorder %s95, %s96
      %p110 = scmp.eq.s32.totalorder %s20, 1
      %p111 = por %p109, %p110
      %p113 = scmp.ne.s32.totalorder %s96, %s112
      %p114 = scmp.eq.s32.totalorder %s20, 0
      %p115 = por %p113, %p114
      %p116 = scmp.le.s32.totalorder 1, %s14
      %p117 = scmp.lt.s32.totalorder %s14, 3
      %p118 = pnand %p116, %p117
      %p119 = pneg %p118
      // Predicated region
      $region9: #{tpu_custom_call.1} parent=5 // pred_check
        _
      $region10: #{tpu_custom_call.1} parent=5 // pred_check_branch
        %121 = sbr.rel (%p118) target = $region12
      $region11: #{tpu_custom_call.1} parent=5 // pred_region
        %s122 = ssub.s32 %s14, 1
        // Predicated region
        $region13: #{tpu_custom_call.1} parent=11 // pred_check
          %p123 = pneg %p80
        $region14: #{tpu_custom_call.1} parent=11 // pred_check_branch
          %125 = sbr.rel (%p123) target = $region16
        $region15: #{tpu_custom_call.1} parent=11 // pred_region
          %p126 = scmp.lt.s32.totalorder %s23, 0
          %s127 = scalar_select %p126, %s23, 0
          %s128 = smul.addr %s127, 8
          %s129 = scalar_lea.vmem %s1, %s128
        $region16: #{tpu_custom_call.1} parent=11 // pred_fallthru
          _
      $region12: #{tpu_custom_call.1} parent=5 // pred_fallthru
        _
      %p130 = scmp.lt.s32.totalorder %s14, 2
      // Predicated region
      $region17: #{tpu_custom_call.1} parent=5 // pred_check
        %p131 = pneg %p130
      $region18: #{tpu_custom_call.1} parent=5 // pred_check_branch
        %133 = sbr.rel (%p131) target = $region20
      $region19: #{tpu_custom_call.1} parent=5 // pred_region
        // Predicated region
        $region21: #{tpu_custom_call.1} parent=19 // pred_check
          %p134 = pneg %p48
        $region22: #{tpu_custom_call.1} parent=19 // pred_check_branch
          %136 = sbr.rel (%p134) target = $region24
        $region23: #{tpu_custom_call.1} parent=19 // pred_region
          %s137 = sand.u32 %s38, 1
          %s138 = scalar_lea.sflag [#allocation3], %s137
          %s139 = sand.u32 %s38, 1
          %s140 = smul.addr %s139, 8
          %s141 = scalar_lea.vmem [#allocation2], %s140
          %143 = vsyncadd %s138, 0
          %s144 = smul.addr %s21, 2
          %s145 = sadd.s32 %s22, %s144
          %s146 = smul.addr %s145, 8
          %s147 = scalar_lea.hbm %s0, %s146
          %s149 = sshll.u32 %s147, 4
          %s150 = int_to_ptr.hbm [resolvable:$true] %s149
          %s151 = sshll.u32 %s141, 4
          %s152 = int_to_ptr.vmem [resolvable:$true] %s151
          %154 = dma.hbm_to_vmem [thread:$0]  %s150, 128, %s152, %s138
        $region24: #{tpu_custom_call.1} parent=19 // pred_fallthru
          _
      $region20: #{tpu_custom_call.1} parent=5 // pred_fallthru
        _
      %p155 = scmp.le.s32.totalorder 1, %s14
      %p156 = scmp.lt.s32.totalorder %s14, 3
      %p157 = pnand %p155, %p156
      %p158 = pneg %p157
      // Predicated region
      $region25: #{tpu_custom_call.1} parent=5 // pred_check
        _
      $region26: #{tpu_custom_call.1} parent=5 // pred_check_branch
        %160 = sbr.rel (%p157) target = $region28
      $region27: #{tpu_custom_call.1} parent=5 // pred_region
        %s161 = ssub.s32 %s14, 1
        %s162 = sand.u32 %s41, 1
        %s163 = scalar_lea.sflag [#allocation3], %s162
        %s164 = sand.u32 %s41, 1
        %s165 = smul.addr %s164, 8
        %s166 = scalar_lea.vmem [#allocation2], %s165
        // Predicated region
        $region29: #{tpu_custom_call.1} parent=27 // pred_check
          %p167 = pneg %p54
        $region30: #{tpu_custom_call.1} parent=27 // pred_check_branch
          %169 = sbr.rel (%p167) target = $region32
        $region31: #{tpu_custom_call.1} parent=27 // pred_region
          %171 = dma.done %s163, 128
        $region32: #{tpu_custom_call.1} parent=27 // pred_fallthru
          _
        %s172 = sand.u32 %s41, 1
        %s173 = scalar_lea.sflag [#allocation3], %s172
        %s174 = sand.u32 %s41, 1
        %s175 = smul.addr %s174, 8
        %s176 = scalar_lea.vmem [#allocation2], %s175
        %p177 = pneg %p54
        %p178 = pneg %p51
        %p179 = scmp.lt.s32.totalorder %s23, 0
        %s180 = scalar_select %p179, %s23, 0
        %s181 = smul.addr %s180, 8
        %s182 = scalar_lea.vmem %s1, %s181
        %p183 = pneg %p80
        %p184 = pneg %p77
        %p185 = pneg %p108
        %p186 = pneg %p105
        %s187 = sand.u32 %s95, 1
        %s188 = scalar_lea.sflag [#allocation4], %s187
        %s189 = sand.u32 %s95, 1
        %s190 = smul.addr %s189, 8
        %s191 = scalar_lea.vmem [#allocation5], %s190
        %p192 = scmp.lt.s32.totalorder %s23, 0
        %s193 = scalar_select %p192, %s23, 0
        %s194 = smul.addr %s193, 8
        %s195 = scalar_lea.vmem %s1, %s194
        %v196 = vld [vmem:[%s195] sm:$0xff]
        %v197 = vld [vmem:[%s166] sm:$0xff]
        %199 = vset.pattern.permute.xlu0 0
        %200 = vperm.xlu0 %199, %v196
        %v201 = vpop.permute.xlu0 %200
        %v203 = vmul.f32 %v197, %v201
        %204 = vset.pattern.permute.xlu0 1
        %205 = vperm.xlu0 %204, %v196
        %v206 = vpop.permute.xlu0 %205
        %v208 = vadd.f32 %v203, %v206
        %209 = vst [vmem:[%s191] sm:$0xff] %v208
        %s210 = sand.u32 %s95, 1
        %s211 = scalar_lea.sflag [#allocation4], %s210
        %s212 = sand.u32 %s95, 1
        %s213 = smul.addr %s212, 8
        %s214 = scalar_lea.vmem [#allocation5], %s213
        // Predicated region
        $region33: #{tpu_custom_call.1} parent=27 // pred_check
          %p215 = pneg %p105
        $region34: #{tpu_custom_call.1} parent=27 // pred_check_branch
          %217 = sbr.rel (%p215) target = $region36
        $region35: #{tpu_custom_call.1} parent=27 // pred_region
          %219 = vsyncadd %s211, 0
          %s220 = smul.addr %s23, 2
          %s221 = sadd.s32 %s24, %s220
          %s222 = smul.addr %s221, 8
          %s223 = scalar_lea.hbm %s2, %s222
          %s225 = sshll.u32 %s214, 4
          %s226 = int_to_ptr.vmem [resolvable:$true] %s225
          %s227 = sshll.u32 %s223, 4
          %s228 = int_to_ptr.hbm [resolvable:$true] %s227
          %230 = dma.vmem_to_hbm [thread:$0]  %s226, 128, %s228, %s211
        $region36: #{tpu_custom_call.1} parent=27 // pred_fallthru
          _
      $region28: #{tpu_custom_call.1} parent=5 // pred_fallthru
        _
      %p231 = scmp.le.s32.totalorder 2, %s14
      // Predicated region
      $region37: #{tpu_custom_call.1} parent=5 // pred_check
        %p232 = pneg %p231
      $region38: #{tpu_custom_call.1} parent=5 // pred_check_branch
        %234 = sbr.rel (%p232) target = $region40
      $region39: #{tpu_custom_call.1} parent=5 // pred_region
        %s235 = ssub.s32 %s14, 2
        // Predicated region
        $region41: #{tpu_custom_call.1} parent=39 // pred_check
          %p236 = pneg %p111
        $region42: #{tpu_custom_call.1} parent=39 // pred_check_branch
          %238 = sbr.rel (%p236) target = $region44
        $region43: #{tpu_custom_call.1} parent=39 // pred_region
          %s239 = sand.u32 %s96, 1
          %s240 = scalar_lea.sflag [#allocation4], %s239
          %s241 = sand.u32 %s96, 1
          %s242 = smul.addr %s241, 8
          %s243 = scalar_lea.vmem [#allocation5], %s242
          %245 = dma.done %s240, 128
        $region44: #{tpu_custom_call.1} parent=39 // pred_fallthru
          _
      $region40: #{tpu_custom_call.1} parent=5 // pred_fallthru
        _
    $region6: #{tpu_custom_call.1} parent=1 // loop_footer
      %s18 = sadd.s32 1, %s14
    $region7: #{tpu_custom_call.1} parent=1 // loop_footer_branch
      %13 = sbr.rel target = $region3
    $region8: #{tpu_custom_call.1} parent=1 // loop_exit
      _
    %246 = vsyncpa [#allocation3], 1
    %s247 = scalar_lea.sflag [#allocation3], 1
    %248 = vsyncpa %s247, 1
    %249 = vsyncpa [#allocation4], 1
    %s250 = scalar_lea.sflag [#allocation4], 1
    %251 = vsyncpa %s250, 1

</llo_original>
